<compile_context>
chip_gen: v5e
topology: v5e:2x2
jax: 0.10.0
libtpu: 0.0.40
codegen_flags: <defaults>
</compile_context>

<pallas_src>
import functools

import jax
import jax.numpy as jnp
from jax import lax
from jax.experimental import pallas as pl
from jax.experimental.pallas import tpu as pltpu


def mha_kernel(x_q_ref, x_kv_ref, wqkv_ref, bqkv_ref, wout_ref, bout_ref, o_ref,
               *, heads, head_dim, inv_scale, kv_tile):
    # x_q_ref : (1, tq, D) bf16   query rows for this (batch, q-block)
    # x_kv_ref: (1, L,  D) bf16   full sequence (for K / V projections)
    # wqkv_ref: (D, 3D)    bf16   fused QKV weight, stored (in, out)
    # bqkv_ref: (1, 3D)    f32
    # wout_ref: (D, D)     bf16   output weight, stored (in, out)
    # bout_ref: (1, D)     f32
    # o_ref   : (1, tq, D) f32
    D = heads * head_dim
    tq = x_q_ref.shape[1]
    L = x_kv_ref.shape[1]

    x_q = x_q_ref[0]                                   # (tq, D) bf16
    x_kv = x_kv_ref[0]                                 # (L, D)  bf16

    # ---- fused projections: big MXU matmuls with f32 accumulation ----
    # Q for this q-tile; 1/sqrt(head_dim) folded in once (bias included).
    q_all = (jnp.dot(x_q, wqkv_ref[:, :D], preferred_element_type=jnp.float32)
             + bqkv_ref[:, :D]) * inv_scale            # (tq, D) f32
    q_all = q_all.astype(jnp.bfloat16)

    # K and V for the whole sequence in a single (L, D) x (D, 2D) matmul.
    kv_all = (jnp.dot(x_kv, wqkv_ref[:, D:3 * D],
                      preferred_element_type=jnp.float32)
              + bqkv_ref[:, D:3 * D]).astype(jnp.bfloat16)   # (L, 2D)
    k_all = kv_all[:, :D]
    v_all = kv_all[:, D:]

    nk = pl.cdiv(L, kv_tile)

    # Output accumulator seeded with the output-projection bias (no concat).
    y = jnp.broadcast_to(bout_ref[...], (tq, D)).astype(jnp.float32)

    for h in range(heads):
        lo, hi = h * head_dim, (h + 1) * head_dim
        q_h = q_all[:, lo:hi]                          # (tq, hd) bf16

        # Flash-style online softmax over KV tiles; statistics kept in f32.
        m_i = jnp.full((tq, 1), -jnp.inf, dtype=jnp.float32)
        l_i = jnp.zeros((tq, 1), dtype=jnp.float32)
        acc = jnp.zeros((tq, head_dim), dtype=jnp.float32)
        for kv in range(nk):
            k_t = k_all[kv * kv_tile:(kv + 1) * kv_tile, lo:hi]   # (tk, hd)
            v_t = v_all[kv * kv_tile:(kv + 1) * kv_tile, lo:hi]   # (tk, hd)
            # Contract on the last dim of both operands -> no explicit k.T.
            s = lax.dot_general(q_h, k_t, (((1,), (1,)), ((), ())),
                                preferred_element_type=jnp.float32)  # (tq, tk)
            m_new = jnp.maximum(m_i, s.max(axis=-1, keepdims=True))
            alpha = jnp.exp(m_i - m_new)
            p = jnp.exp(s - m_new)
            l_i = alpha * l_i + p.sum(axis=-1, keepdims=True)
            acc = alpha * acc + jnp.dot(p.astype(jnp.bfloat16), v_t,
                                        preferred_element_type=jnp.float32)
            m_i = m_new

        # Deferred normalization on the (tq, hd) output (EUP reciprocal).
        head_out = acc * pl.reciprocal(l_i, approx=True)          # (tq, hd)

        # Accumulate this head's contribution to the output projection.
        y = y + jnp.dot(head_out.astype(jnp.bfloat16), wout_ref[lo:hi, :],
                        preferred_element_type=jnp.float32)       # (tq, D)

    o_ref[0] = y.astype(o_ref.dtype)


def multi_head_attention(x, w_qkv, b_qkv, w_out, b_out, *, heads,
                         q_tile=None, kv_tile=None):
    B, L, D = x.shape
    assert D % heads == 0
    head_dim = D // heads
    inv_scale = 1.0 / (float(head_dim) ** 0.5)

    # q-block tiling: use the full sequence for small L, 256-row tiles otherwise.
    if q_tile is None:
        q_tile = 256 if (L > 256 and L % 256 == 0) else L
    if kv_tile is None:
        kv_tile = min(L, 512)
    nq = pl.cdiv(L, q_tile)

    # bf16 operands for the MXU (halves HBM/VMEM for x and weights);
    # biases, softmax statistics and accumulators stay in f32.
    x_b = x.astype(jnp.bfloat16)
    w_qkv_b = w_qkv.astype(jnp.bfloat16)
    w_out_b = w_out.astype(jnp.bfloat16)
    b_qkv_f = b_qkv.astype(jnp.float32)
    b_out_f = b_out.astype(jnp.float32)

    kernel = functools.partial(mha_kernel, heads=heads, head_dim=head_dim,
                               inv_scale=inv_scale, kv_tile=kv_tile)

    flops = B * (2 * L * D * 3 * D                 # fused qkv projection
                 + heads * 4 * L * L * head_dim    # scores + p @ v
                 + 2 * L * D * D)                  # output projection
    transcendentals = B * heads * L * L            # exp in softmax
    bytes_accessed = (x_b.size * 2 + w_qkv_b.size * 2 + w_out_b.size * 2
                      + b_qkv_f.size * 4 + b_out_f.size * 4 + B * L * D * 4)

    return pl.pallas_call(
        kernel,
        out_shape=jax.ShapeDtypeStruct((B, L, D), jnp.float32),
        grid_spec=pltpu.PrefetchScalarGridSpec(
            num_scalar_prefetch=0,
            grid=(B, nq),
            in_specs=[
                pl.BlockSpec((1, q_tile, D), lambda b, qi: (b, qi, 0)),  # x (q rows)
                pl.BlockSpec((1, L, D), lambda b, qi: (b, 0, 0)),        # x (kv rows)
                pl.BlockSpec((D, 3 * D), lambda b, qi: (0, 0)),          # W_qkv
                pl.BlockSpec((1, 3 * D), lambda b, qi: (0, 0)),          # b_qkv
                pl.BlockSpec((D, D), lambda b, qi: (0, 0)),              # W_out
                pl.BlockSpec((1, D), lambda b, qi: (0, 0)),              # b_out
            ],
            out_specs=pl.BlockSpec((1, q_tile, D), lambda b, qi: (b, qi, 0)),
        ),
        compiler_params=pltpu.CompilerParams(
            dimension_semantics=("parallel", "parallel"),
            vmem_limit_bytes=48 * 1024 * 1024),
        cost_estimate=pl.CostEstimate(flops=int(flops),
                                      transcendentals=int(transcendentals),
                                      bytes_accessed=int(bytes_accessed)),
    )(x_b, x_b, w_qkv_b, b_qkv_f, w_out_b, b_out_f)


def mha_reference(x, w_qkv, b_qkv, w_out, b_out, *, heads):
    """Pure-JAX f32 reference mirroring the PyTorch forward."""
    B, L, D = x.shape
    hd = D // heads
    qkv = x @ w_qkv + b_qkv[0]                           # (B, L, 3D)
    qkv = qkv.reshape(B, L, 3, heads, hd).transpose(2, 0, 3, 1, 4)
    q, k, v = qkv[0], qkv[1], qkv[2]                     # (B, H, L, hd)
    scores = jnp.einsum('bhqd,bhkd->bhqk', q, k) / jnp.sqrt(jnp.float32(hd))
    attn = jax.nn.softmax(scores, axis=-1)
    out = jnp.einsum('bhqk,bhkd->bhqd', attn, v)         # (B, H, L, hd)
    out = out.transpose(0, 2, 1, 3).reshape(B, L, D)
    return out @ w_out + b_out[0]


if __name__ == "__main__":
    B, L, D, heads = 2, 8, 32, 4

    key = jax.random.PRNGKey(0)
    kx, kw1, kb1, kw2, kb2 = jax.random.split(key, 5)

    x = jax.random.normal(kx, (B, L, D), dtype=jnp.float32)
    # Parameters stored as (in, out) + row-vector biases (== nn.Linear W.T, b).
    w_qkv = jax.random.normal(kw1, (D, 3 * D), dtype=jnp.float32) * 0.05
    b_qkv = jax.random.normal(kb1, (1, 3 * D), dtype=jnp.float32) * 0.05
    w_out = jax.random.normal(kw2, (D, D), dtype=jnp.float32) * 0.05
    b_out = jax.random.normal(kb2, (1, D), dtype=jnp.float32) * 0.05

    y = multi_head_attention(x, w_qkv, b_qkv, w_out, b_out, heads=heads)
    y = jax.block_until_ready(y)

    y_ref = mha_reference(x, w_qkv, b_qkv, w_out, b_out, heads=heads)
    assert y.shape == (B, L, D)
    # bf16 MXU operands with f32 accumulation -> loosened tolerance.
    assert jnp.allclose(y, y_ref, atol=2e-2, rtol=2e-2), "mismatch vs reference"

    print("KERNEL_OK")
</pallas_src>

<mosaic_0001>
module attributes {stable_mosaic.version = 11 : i64} {
  func.func @mha_kernel(%arg0: i32, %arg1: i32, %arg2: memref<1x8x32xbf16, #tpu.memory_space<vmem>>, %arg3: memref<1x8x32xbf16, #tpu.memory_space<vmem>>, %arg4: memref<32x96xbf16, #tpu.memory_space<vmem>>, %arg5: memref<1x96xf32, #tpu.memory_space<vmem>>, %arg6: memref<32x32xbf16, #tpu.memory_space<vmem>>, %arg7: memref<1x32xf32, #tpu.memory_space<vmem>>, %arg8: memref<1x8x32xf32, #tpu.memory_space<vmem>>) attributes {dimension_semantics = [#tpu.dimension_semantics<parallel>, #tpu.dimension_semantics<parallel>], iteration_bounds = array<i64: 2, 1>, scalar_prefetch = 0 : i64, scratch_operands = 0 : i64, tpu.core_type = #tpu.core_type<tc>, window_params = [{transform_indices = @transform_0, window_bounds = array<i64: 1, 8, 32>}, {transform_indices = @transform_1, window_bounds = array<i64: 1, 8, 32>}, {pipeline_mode = #tpu.pipeline_mode<synchronous>, transform_indices = @transform_2, window_bounds = array<i64: 32, 96>}, {pipeline_mode = #tpu.pipeline_mode<synchronous>, transform_indices = @transform_3, window_bounds = array<i64: 1, 96>}, {pipeline_mode = #tpu.pipeline_mode<synchronous>, transform_indices = @transform_4, window_bounds = array<i64: 32, 32>}, {pipeline_mode = #tpu.pipeline_mode<synchronous>, transform_indices = @transform_5, window_bounds = array<i64: 1, 32>}, {transform_indices = @transform_6, window_bounds = array<i64: 1, 8, 32>}]} {
    %c0 = arith.constant 0 : index
    %c0_0 = arith.constant 0 : index
    %c0_1 = arith.constant 0 : index
    %0 = vector.load %arg2[%c0, %c0_0, %c0_1] : memref<1x8x32xbf16, #tpu.memory_space<vmem>>, vector<1x8x32xbf16>
    %1 = vector.shape_cast %0 : vector<1x8x32xbf16> to vector<8x32xbf16>
    %c0_2 = arith.constant 0 : index
    %c0_3 = arith.constant 0 : index
    %c0_4 = arith.constant 0 : index
    %2 = vector.load %arg3[%c0_2, %c0_3, %c0_4] : memref<1x8x32xbf16, #tpu.memory_space<vmem>>, vector<1x8x32xbf16>
    %3 = vector.shape_cast %2 : vector<1x8x32xbf16> to vector<8x32xbf16>
    %c0_5 = arith.constant 0 : index
    %c0_6 = arith.constant 0 : index
    %4 = vector.load %arg4[%c0_5, %c0_6] : memref<32x96xbf16, #tpu.memory_space<vmem>>, vector<32x32xbf16>
    %cst = arith.constant dense<0.000000e+00> : vector<8x32xf32>
    %5 = tpu.matmul %1, %4, %cst {dimension_numbers = #tpu.dot_dimension_numbers<[1], [0], [0], [1], [0, 0, 1, 1], [], []>} : vector<8x32xbf16>, vector<32x32xbf16>, vector<8x32xf32> -> vector<8x32xf32>
    %c0_7 = arith.constant 0 : index
    %c0_8 = arith.constant 0 : index
    %6 = vector.load %arg5[%c0_7, %c0_8] : memref<1x96xf32, #tpu.memory_space<vmem>>, vector<1x32xf32>
    %7 = vector.broadcast %6 : vector<1x32xf32> to vector<8x32xf32>
    %8 = arith.addf %5, %7 : vector<8x32xf32>
    %cst_9 = arith.constant 0.353553385 : f32
    %9 = vector.broadcast %cst_9 : f32 to vector<8x32xf32>
    %10 = arith.mulf %8, %9 : vector<8x32xf32>
    %11 = arith.truncf %10 : vector<8x32xf32> to vector<8x32xbf16>
    %c0_10 = arith.constant 0 : index
    %c32 = arith.constant 32 : index
    %12 = vector.load %arg4[%c0_10, %c32] : memref<32x96xbf16, #tpu.memory_space<vmem>>, vector<32x64xbf16>
    %cst_11 = arith.constant dense<0.000000e+00> : vector<8x64xf32>
    %13 = tpu.matmul %3, %12, %cst_11 {dimension_numbers = #tpu.dot_dimension_numbers<[1], [0], [0], [1], [0, 0, 1, 1], [], []>} : vector<8x32xbf16>, vector<32x64xbf16>, vector<8x64xf32> -> vector<8x64xf32>
    %c0_12 = arith.constant 0 : index
    %c32_13 = arith.constant 32 : index
    %14 = vector.load %arg5[%c0_12, %c32_13] : memref<1x96xf32, #tpu.memory_space<vmem>>, vector<1x64xf32>
    %15 = vector.broadcast %14 : vector<1x64xf32> to vector<8x64xf32>
    %16 = arith.addf %13, %15 : vector<8x64xf32>
    %17 = arith.truncf %16 : vector<8x64xf32> to vector<8x64xbf16>
    %18 = vector.extract_strided_slice %17 {offsets = [0, 0], sizes = [8, 32], strides = [1, 1]} : vector<8x64xbf16> to vector<8x32xbf16>
    %19 = vector.extract_strided_slice %17 {offsets = [0, 32], sizes = [8, 32], strides = [1, 1]} : vector<8x64xbf16> to vector<8x32xbf16>
    %c0_14 = arith.constant 0 : index
    %c0_15 = arith.constant 0 : index
    %20 = vector.load %arg7[%c0_14, %c0_15] : memref<1x32xf32, #tpu.memory_space<vmem>>, vector<1x32xf32>
    %21 = vector.shape_cast %20 : vector<1x32xf32> to vector<1x32xf32>
    %22 = vector.broadcast %21 : vector<1x32xf32> to vector<8x32xf32>
    %23 = vector.extract_strided_slice %11 {offsets = [0, 0], sizes = [8, 8], strides = [1, 1]} : vector<8x32xbf16> to vector<8x8xbf16>
    %cst_16 = arith.constant 0xFF800000 : f32
    %24 = vector.broadcast %cst_16 : f32 to vector<8x1xf32>
    %cst_17 = arith.constant 0.000000e+00 : f32
    %25 = vector.broadcast %cst_17 : f32 to vector<8x1xf32>
    %cst_18 = arith.constant 0.000000e+00 : f32
    %26 = vector.broadcast %cst_18 : f32 to vector<8x8xf32>
    %27 = vector.extract_strided_slice %18 {offsets = [0, 0], sizes = [8, 8], strides = [1, 1]} : vector<8x32xbf16> to vector<8x8xbf16>
    %28 = vector.extract_strided_slice %19 {offsets = [0, 0], sizes = [8, 8], strides = [1, 1]} : vector<8x32xbf16> to vector<8x8xbf16>
    %cst_19 = arith.constant dense<0.000000e+00> : vector<8x8xf32>
    %29 = tpu.matmul %23, %27, %cst_19 {dimension_numbers = #tpu.dot_dimension_numbers<[1], [1], [0], [0], [0, 0, 1, 0], [], []>} : vector<8x8xbf16>, vector<8x8xbf16>, vector<8x8xf32> -> vector<8x8xf32>
    %cst_20 = arith.constant dense<0xFF800000> : vector<8xf32>
    %30 = vector.multi_reduction <maximumf>, %29, %cst_20 [1] : vector<8x8xf32> to vector<8xf32>
    %31 = vector.shape_cast %30 : vector<8xf32> to vector<8x1xf32>
    %32 = arith.maximumf %24, %31 : vector<8x1xf32>
    %33 = arith.subf %24, %32 : vector<8x1xf32>
    %34 = math.exp %33 : vector<8x1xf32>
    %35 = vector.broadcast %32 : vector<8x1xf32> to vector<8x8xf32>
    %36 = arith.subf %29, %35 : vector<8x8xf32>
    %37 = math.exp %36 : vector<8x8xf32>
    %38 = arith.mulf %34, %25 : vector<8x1xf32>
    %cst_21 = arith.constant dense<0.000000e+00> : vector<8xf32>
    %39 = vector.multi_reduction <add>, %37, %cst_21 [1] : vector<8x8xf32> to vector<8xf32>
    %40 = vector.shape_cast %39 : vector<8xf32> to vector<8x1xf32>
    %41 = arith.addf %38, %40 : vector<8x1xf32>
    %42 = vector.broadcast %34 : vector<8x1xf32> to vector<8x8xf32>
    %43 = arith.mulf %42, %26 : vector<8x8xf32>
    %44 = arith.truncf %37 : vector<8x8xf32> to vector<8x8xbf16>
    %cst_22 = arith.constant dense<0.000000e+00> : vector<8x8xf32>
    %45 = tpu.matmul %44, %28, %cst_22 {dimension_numbers = #tpu.dot_dimension_numbers<[1], [0], [0], [1], [0, 0, 1, 1], [], []>} : vector<8x8xbf16>, vector<8x8xbf16>, vector<8x8xf32> -> vector<8x8xf32>
    %46 = arith.addf %43, %45 : vector<8x8xf32>
    %47 = tpu.reciprocal %41 {approx = true} : vector<8x1xf32> -> vector<8x1xf32>
    %48 = vector.broadcast %47 : vector<8x1xf32> to vector<8x8xf32>
    %49 = arith.mulf %46, %48 : vector<8x8xf32>
    %50 = arith.truncf %49 : vector<8x8xf32> to vector<8x8xbf16>
    %c0_23 = arith.constant 0 : index
    %c0_24 = arith.constant 0 : index
    %51 = vector.load %arg6[%c0_23, %c0_24] : memref<32x32xbf16, #tpu.memory_space<vmem>>, vector<8x32xbf16>
    %cst_25 = arith.constant dense<0.000000e+00> : vector<8x32xf32>
    %52 = tpu.matmul %50, %51, %cst_25 {dimension_numbers = #tpu.dot_dimension_numbers<[1], [0], [0], [1], [0, 0, 1, 1], [], []>} : vector<8x8xbf16>, vector<8x32xbf16>, vector<8x32xf32> -> vector<8x32xf32>
    %53 = arith.addf %22, %52 : vector<8x32xf32>
    %54 = vector.extract_strided_slice %11 {offsets = [0, 8], sizes = [8, 8], strides = [1, 1]} : vector<8x32xbf16> to vector<8x8xbf16>
    %cst_26 = arith.constant 0xFF800000 : f32
    %55 = vector.broadcast %cst_26 : f32 to vector<8x1xf32>
    %cst_27 = arith.constant 0.000000e+00 : f32
    %56 = vector.broadcast %cst_27 : f32 to vector<8x1xf32>
    %cst_28 = arith.constant 0.000000e+00 : f32
    %57 = vector.broadcast %cst_28 : f32 to vector<8x8xf32>
    %58 = vector.extract_strided_slice %18 {offsets = [0, 8], sizes = [8, 8], strides = [1, 1]} : vector<8x32xbf16> to vector<8x8xbf16>
    %59 = vector.extract_strided_slice %19 {offsets = [0, 8], sizes = [8, 8], strides = [1, 1]} : vector<8x32xbf16> to vector<8x8xbf16>
    %cst_29 = arith.constant dense<0.000000e+00> : vector<8x8xf32>
    %60 = tpu.matmul %54, %58, %cst_29 {dimension_numbers = #tpu.dot_dimension_numbers<[1], [1], [0], [0], [0, 0, 1, 0], [], []>} : vector<8x8xbf16>, vector<8x8xbf16>, vector<8x8xf32> -> vector<8x8xf32>
    %cst_30 = arith.constant dense<0xFF800000> : vector<8xf32>
    %61 = vector.multi_reduction <maximumf>, %60, %cst_30 [1] : vector<8x8xf32> to vector<8xf32>
    %62 = vector.shape_cast %61 : vector<8xf32> to vector<8x1xf32>
    %63 = arith.maximumf %55, %62 : vector<8x1xf32>
    %64 = arith.subf %55, %63 : vector<8x1xf32>
    %65 = math.exp %64 : vector<8x1xf32>
    %66 = vector.broadcast %63 : vector<8x1xf32> to vector<8x8xf32>
    %67 = arith.subf %60, %66 : vector<8x8xf32>
    %68 = math.exp %67 : vector<8x8xf32>
    %69 = arith.mulf %65, %56 : vector<8x1xf32>
    %cst_31 = arith.constant dense<0.000000e+00> : vector<8xf32>
    %70 = vector.multi_reduction <add>, %68, %cst_31 [1] : vector<8x8xf32> to vector<8xf32>
    %71 = vector.shape_cast %70 : vector<8xf32> to vector<8x1xf32>
    %72 = arith.addf %69, %71 : vector<8x1xf32>
    %73 = vector.broadcast %65 : vector<8x1xf32> to vector<8x8xf32>
    %74 = arith.mulf %73, %57 : vector<8x8xf32>
    %75 = arith.truncf %68 : vector<8x8xf32> to vector<8x8xbf16>
    %cst_32 = arith.constant dense<0.000000e+00> : vector<8x8xf32>
    %76 = tpu.matmul %75, %59, %cst_32 {dimension_numbers = #tpu.dot_dimension_numbers<[1], [0], [0], [1], [0, 0, 1, 1], [], []>} : vector<8x8xbf16>, vector<8x8xbf16>, vector<8x8xf32> -> vector<8x8xf32>
    %77 = arith.addf %74, %76 : vector<8x8xf32>
    %78 = tpu.reciprocal %72 {approx = true} : vector<8x1xf32> -> vector<8x1xf32>
    %79 = vector.broadcast %78 : vector<8x1xf32> to vector<8x8xf32>
    %80 = arith.mulf %77, %79 : vector<8x8xf32>
    %81 = arith.truncf %80 : vector<8x8xf32> to vector<8x8xbf16>
    %c8 = arith.constant 8 : index
    %c0_33 = arith.constant 0 : index
    %82 = vector.load %arg6[%c8, %c0_33] : memref<32x32xbf16, #tpu.memory_space<vmem>>, vector<8x32xbf16>
    %cst_34 = arith.constant dense<0.000000e+00> : vector<8x32xf32>
    %83 = tpu.matmul %81, %82, %cst_34 {dimension_numbers = #tpu.dot_dimension_numbers<[1], [0], [0], [1], [0, 0, 1, 1], [], []>} : vector<8x8xbf16>, vector<8x32xbf16>, vector<8x32xf32> -> vector<8x32xf32>
    %84 = arith.addf %53, %83 : vector<8x32xf32>
    %85 = vector.extract_strided_slice %11 {offsets = [0, 16], sizes = [8, 8], strides = [1, 1]} : vector<8x32xbf16> to vector<8x8xbf16>
    %cst_35 = arith.constant 0xFF800000 : f32
    %86 = vector.broadcast %cst_35 : f32 to vector<8x1xf32>
    %cst_36 = arith.constant 0.000000e+00 : f32
    %87 = vector.broadcast %cst_36 : f32 to vector<8x1xf32>
    %cst_37 = arith.constant 0.000000e+00 : f32
    %88 = vector.broadcast %cst_37 : f32 to vector<8x8xf32>
    %89 = vector.extract_strided_slice %18 {offsets = [0, 16], sizes = [8, 8], strides = [1, 1]} : vector<8x32xbf16> to vector<8x8xbf16>
    %90 = vector.extract_strided_slice %19 {offsets = [0, 16], sizes = [8, 8], strides = [1, 1]} : vector<8x32xbf16> to vector<8x8xbf16>
    %cst_38 = arith.constant dense<0.000000e+00> : vector<8x8xf32>
    %91 = tpu.matmul %85, %89, %cst_38 {dimension_numbers = #tpu.dot_dimension_numbers<[1], [1], [0], [0], [0, 0, 1, 0], [], []>} : vector<8x8xbf16>, vector<8x8xbf16>, vector<8x8xf32> -> vector<8x8xf32>
    %cst_39 = arith.constant dense<0xFF800000> : vector<8xf32>
    %92 = vector.multi_reduction <maximumf>, %91, %cst_39 [1] : vector<8x8xf32> to vector<8xf32>
    %93 = vector.shape_cast %92 : vector<8xf32> to vector<8x1xf32>
    %94 = arith.maximumf %86, %93 : vector<8x1xf32>
    %95 = arith.subf %86, %94 : vector<8x1xf32>
    %96 = math.exp %95 : vector<8x1xf32>
    %97 = vector.broadcast %94 : vector<8x1xf32> to vector<8x8xf32>
    %98 = arith.subf %91, %97 : vector<8x8xf32>
    %99 = math.exp %98 : vector<8x8xf32>
    %100 = arith.mulf %96, %87 : vector<8x1xf32>
    %cst_40 = arith.constant dense<0.000000e+00> : vector<8xf32>
    %101 = vector.multi_reduction <add>, %99, %cst_40 [1] : vector<8x8xf32> to vector<8xf32>
    %102 = vector.shape_cast %101 : vector<8xf32> to vector<8x1xf32>
    %103 = arith.addf %100, %102 : vector<8x1xf32>
    %104 = vector.broadcast %96 : vector<8x1xf32> to vector<8x8xf32>
    %105 = arith.mulf %104, %88 : vector<8x8xf32>
    %106 = arith.truncf %99 : vector<8x8xf32> to vector<8x8xbf16>
    %cst_41 = arith.constant dense<0.000000e+00> : vector<8x8xf32>
    %107 = tpu.matmul %106, %90, %cst_41 {dimension_numbers = #tpu.dot_dimension_numbers<[1], [0], [0], [1], [0, 0, 1, 1], [], []>} : vector<8x8xbf16>, vector<8x8xbf16>, vector<8x8xf32> -> vector<8x8xf32>
    %108 = arith.addf %105, %107 : vector<8x8xf32>
    %109 = tpu.reciprocal %103 {approx = true} : vector<8x1xf32> -> vector<8x1xf32>
    %110 = vector.broadcast %109 : vector<8x1xf32> to vector<8x8xf32>
    %111 = arith.mulf %108, %110 : vector<8x8xf32>
    %112 = arith.truncf %111 : vector<8x8xf32> to vector<8x8xbf16>
    %c16 = arith.constant 16 : index
    %c0_42 = arith.constant 0 : index
    %113 = vector.load %arg6[%c16, %c0_42] : memref<32x32xbf16, #tpu.memory_space<vmem>>, vector<8x32xbf16>
    %cst_43 = arith.constant dense<0.000000e+00> : vector<8x32xf32>
    %114 = tpu.matmul %112, %113, %cst_43 {dimension_numbers = #tpu.dot_dimension_numbers<[1], [0], [0], [1], [0, 0, 1, 1], [], []>} : vector<8x8xbf16>, vector<8x32xbf16>, vector<8x32xf32> -> vector<8x32xf32>
    %115 = arith.addf %84, %114 : vector<8x32xf32>
    %116 = vector.extract_strided_slice %11 {offsets = [0, 24], sizes = [8, 8], strides = [1, 1]} : vector<8x32xbf16> to vector<8x8xbf16>
    %cst_44 = arith.constant 0xFF800000 : f32
    %117 = vector.broadcast %cst_44 : f32 to vector<8x1xf32>
    %cst_45 = arith.constant 0.000000e+00 : f32
    %118 = vector.broadcast %cst_45 : f32 to vector<8x1xf32>
    %cst_46 = arith.constant 0.000000e+00 : f32
    %119 = vector.broadcast %cst_46 : f32 to vector<8x8xf32>
    %120 = vector.extract_strided_slice %18 {offsets = [0, 24], sizes = [8, 8], strides = [1, 1]} : vector<8x32xbf16> to vector<8x8xbf16>
    %121 = vector.extract_strided_slice %19 {offsets = [0, 24], sizes = [8, 8], strides = [1, 1]} : vector<8x32xbf16> to vector<8x8xbf16>
    %cst_47 = arith.constant dense<0.000000e+00> : vector<8x8xf32>
    %122 = tpu.matmul %116, %120, %cst_47 {dimension_numbers = #tpu.dot_dimension_numbers<[1], [1], [0], [0], [0, 0, 1, 0], [], []>} : vector<8x8xbf16>, vector<8x8xbf16>, vector<8x8xf32> -> vector<8x8xf32>
    %cst_48 = arith.constant dense<0xFF800000> : vector<8xf32>
    %123 = vector.multi_reduction <maximumf>, %122, %cst_48 [1] : vector<8x8xf32> to vector<8xf32>
    %124 = vector.shape_cast %123 : vector<8xf32> to vector<8x1xf32>
    %125 = arith.maximumf %117, %124 : vector<8x1xf32>
    %126 = arith.subf %117, %125 : vector<8x1xf32>
    %127 = math.exp %126 : vector<8x1xf32>
    %128 = vector.broadcast %125 : vector<8x1xf32> to vector<8x8xf32>
    %129 = arith.subf %122, %128 : vector<8x8xf32>
    %130 = math.exp %129 : vector<8x8xf32>
    %131 = arith.mulf %127, %118 : vector<8x1xf32>
    %cst_49 = arith.constant dense<0.000000e+00> : vector<8xf32>
    %132 = vector.multi_reduction <add>, %130, %cst_49 [1] : vector<8x8xf32> to vector<8xf32>
    %133 = vector.shape_cast %132 : vector<8xf32> to vector<8x1xf32>
    %134 = arith.addf %131, %133 : vector<8x1xf32>
    %135 = vector.broadcast %127 : vector<8x1xf32> to vector<8x8xf32>
    %136 = arith.mulf %135, %119 : vector<8x8xf32>
    %137 = arith.truncf %130 : vector<8x8xf32> to vector<8x8xbf16>
    %cst_50 = arith.constant dense<0.000000e+00> : vector<8x8xf32>
    %138 = tpu.matmul %137, %121, %cst_50 {dimension_numbers = #tpu.dot_dimension_numbers<[1], [0], [0], [1], [0, 0, 1, 1], [], []>} : vector<8x8xbf16>, vector<8x8xbf16>, vector<8x8xf32> -> vector<8x8xf32>
    %139 = arith.addf %136, %138 : vector<8x8xf32>
    %140 = tpu.reciprocal %134 {approx = true} : vector<8x1xf32> -> vector<8x1xf32>
    %141 = vector.broadcast %140 : vector<8x1xf32> to vector<8x8xf32>
    %142 = arith.mulf %139, %141 : vector<8x8xf32>
    %143 = arith.truncf %142 : vector<8x8xf32> to vector<8x8xbf16>
    %c24 = arith.constant 24 : index
    %c0_51 = arith.constant 0 : index
    %144 = vector.load %arg6[%c24, %c0_51] : memref<32x32xbf16, #tpu.memory_space<vmem>>, vector<8x32xbf16>
    %cst_52 = arith.constant dense<0.000000e+00> : vector<8x32xf32>
    %145 = tpu.matmul %143, %144, %cst_52 {dimension_numbers = #tpu.dot_dimension_numbers<[1], [0], [0], [1], [0, 0, 1, 1], [], []>} : vector<8x8xbf16>, vector<8x32xbf16>, vector<8x32xf32> -> vector<8x32xf32>
    %146 = arith.addf %115, %145 : vector<8x32xf32>
    %c0_53 = arith.constant 0 : index
    %c0_54 = arith.constant 0 : index
    %c0_55 = arith.constant 0 : index
    %147 = vector.load %arg8[%c0_53, %c0_54, %c0_55] : memref<1x8x32xf32, #tpu.memory_space<vmem>>, vector<1x8x32xf32>
    %148 = vector.shape_cast %147 : vector<1x8x32xf32> to vector<8x32xf32>
    %149 = vector.shape_cast %146 : vector<8x32xf32> to vector<1x8x32xf32>
    tpu.vector_store %arg8[%c0_53, %c0_54, %c0_55], %149 {strides = array<i32>} : memref<1x8x32xf32, #tpu.memory_space<vmem>>, vector<1x8x32xf32>,
    return
  }
  func.func @transform_0(%arg0: i32, %arg1: i32) -> (i32, i32, i32) {
    %c0_i32 = arith.constant 0 : i32
    %c0_i32_0 = arith.constant 0 : i32
    return %arg0, %arg1, %c0_i32 : i32, i32, i32
  }
  func.func @transform_1(%arg0: i32, %arg1: i32) -> (i32, i32, i32) {
    %c0_i32 = arith.constant 0 : i32
    %c0_i32_0 = arith.constant 0 : i32
    %c0_i32_1 = arith.constant 0 : i32
    return %arg0, %c0_i32, %c0_i32_0 : i32, i32, i32
  }
  func.func @transform_2(%arg0: i32, %arg1: i32) -> (i32, i32) {
    %c0_i32 = arith.constant 0 : i32
    %c0_i32_0 = arith.constant 0 : i32
    %c0_i32_1 = arith.constant 0 : i32
    return %c0_i32, %c0_i32_0 : i32, i32
  }
  func.func @transform_3(%arg0: i32, %arg1: i32) -> (i32, i32) {
    %c0_i32 = arith.constant 0 : i32
    %c0_i32_0 = arith.constant 0 : i32
    %c0_i32_1 = arith.constant 0 : i32
    return %c0_i32, %c0_i32_0 : i32, i32
  }
  func.func @transform_4(%arg0: i32, %arg1: i32) -> (i32, i32) {
    %c0_i32 = arith.constant 0 : i32
    %c0_i32_0 = arith.constant 0 : i32
    %c0_i32_1 = arith.constant 0 : i32
    return %c0_i32, %c0_i32_0 : i32, i32
  }
  func.func @transform_5(%arg0: i32, %arg1: i32) -> (i32, i32) {
    %c0_i32 = arith.constant 0 : i32
    %c0_i32_0 = arith.constant 0 : i32
    %c0_i32_1 = arith.constant 0 : i32
    return %c0_i32, %c0_i32_0 : i32, i32
  }
  func.func @transform_6(%arg0: i32, %arg1: i32) -> (i32, i32, i32) {
    %c0_i32 = arith.constant 0 : i32
    %c0_i32_0 = arith.constant 0 : i32
    return %arg0, %arg1, %c0_i32 : i32, i32, i32
  }
}

</mosaic_0001>

<llo_original>
// kernel: tpu_custom_call.1
$region0: #{tpu_custom_call.1}
  #allocation0 [shape = 'u32[]', space=smem, size = 0x4, offset = 0x4, fixed_abs, tag = 'smem constant byte address 0x4 - core index']
  #allocation1 [shape = 'u32[72,128]{1,0:T(1,128)}', space=vmem, size = 0x9000, scoped, tag = 'internal scratch']
  %s0 = inlined_call_operand.hbm [shape: bf16[2,8,32], index: 0, kind: input, shape index: {}]
  %s1 = inlined_call_operand.hbm [shape: bf16[2,8,32], index: 1, kind: input, shape index: {}]
  %s2 = inlined_call_operand.hbm [shape: bf16[32,96], index: 2, kind: input, shape index: {}]
  %s3 = inlined_call_operand.vmem [shape: f32[1,96], index: 3, kind: input, shape index: {}]
  %s4 = inlined_call_operand.hbm [shape: bf16[32,32], index: 4, kind: input, shape index: {}]
  %s5 = inlined_call_operand.vmem [shape: f32[1,32], index: 5, kind: input, shape index: {}]
  %s6 = inlined_call_operand.hbm [shape: f32[2,8,32], index: 6, kind: output, shape index: {}]
  %s7 = sld [smem:[#allocation0]]
  $region73: #{tpu_custom_call.1} parent=0
    _
  %s9 = ssub.s32 1, %s7
  %s10 = scalar_select 0, %s9, %s7
  $region1: #{tpu_custom_call.1} parent=0
    #allocation2 [shape = 'u8[4096]{0}', space=vmem, size = 0x1000, scoped, tag = 'input window, operand 0']
    #allocation3 [shape = 's32[2]{0}', space=sflag, size = 0x8, scoped, tag = 'scoped memory for tpu_custom_call.1']
    #allocation4 [shape = 's32[2]{0}', space=sflag, size = 0x8, scoped, tag = 'scoped memory for tpu_custom_call.1']
    #allocation5 [shape = 'u8[4096]{0}', space=vmem, size = 0x1000, scoped, tag = 'input window, operand 1']
    #allocation6 [shape = 's32[2]{0}', space=sflag, size = 0x8, scoped, tag = 'scoped memory for tpu_custom_call.1']
    #allocation7 [shape = 'u8[8192]{0}', space=vmem, size = 0x2000, scoped, tag = 'input window, operand 2, single buffered']
    #allocation8 [shape = 'u8[8192]{0}', space=vmem, size = 0x2000, scoped, tag = 'input window, operand 4, single buffered']
    #allocation9 [shape = 's32[1]{0}', space=sflag, size = 0x4, scoped, tag = 'scoped memory for tpu_custom_call.1']
    #allocation10 [shape = 'u8[8192]{0}', space=vmem, size = 0x2000, scoped, tag = 'output window, operand 0']
    %11 = vsyncpa [#allocation3], 0
    %s12 = scalar_lea.sflag [#allocation3], 1
    %13 = vsyncpa %s12, 0
    %14 = vsyncpa [#allocation6], 0
    %s15 = scalar_lea.sflag [#allocation6], 1
    %16 = vsyncpa %s15, 0
    %17 = vsyncpa [#allocation9], 0
    %18 = vsyncpa [#allocation4], 0
    %s19 = scalar_lea.sflag [#allocation4], 1
    %20 = vsyncpa %s19, 0
    loop: start=0, step=1, limit=4
    $region2: #{tpu_custom_call.1} parent=1 // loop_pre_header
      _
    $region3: #{tpu_custom_call.1} parent=1 // loop_header
      %s22 = sphi 0, %s26
      %p23 = scmp.ge.s32.totalorder %s22, 4
      %s29 = sphi 0, %s41
      %s30 = sphi 0, %s37
      %s31 = sphi 0, %s29
      %s32 = sphi 0, %s30
      %s33 = sphi 0, %s31
      %s34 = sphi 0, %s32
      %s46 = sphi 0, %s48
      %s49 = sphi 0, %s46
      %s50 = sphi 0, %s49
      %s66 = sphi 0, %s50
      %s72 = sphi 0, %s74
      %s75 = sphi 0, %s72
      %s76 = sphi 0, %s75
      %s92 = sphi 0, %s76
      %s96 = sphi 0, %s96
      %s98 = sphi 0, %s96
      %s99 = sphi 0, %s98
      %s113 = sphi 0, %s99
      %s117 = sphi 0, %s117
      %s119 = sphi 0, %s117
      %s120 = sphi 0, %s119
      %s134 = sphi 0, %s120
      %s138 = sphi 0, %s138
      %s140 = sphi 0, %s138
      %s141 = sphi 0, %s140
      %s155 = sphi 0, %s141
      %s159 = sphi 0, %s159
      %s161 = sphi 0, %s159
      %s162 = sphi 0, %s161
      %s176 = sphi 0, %s162
      %s184 = sphi 0, %s186
      %s187 = sphi 0, %s184
      %s188 = sphi 0, %s187
      %s204 = sphi 0, %s188
    $region4: #{tpu_custom_call.1} parent=1 // loop_header_branch
      %25 = sbr.rel (%p23) target = $region8
    $region5: #{tpu_custom_call.1} parent=1 // loop_body
      %s27 = ssub.s32 %s22, 1
      %s28 = ssub.s32 %s22, 2
      %s35 = sadd.s32 1, %s30
      %p36 = scmp.ge.s32.totalorder %s35, 1
      %s37 = scalar_select %p36, 0, %s35
      %s38 = sadd.s32 1, %s29
      %s39 = scalar_select %p36, %s38, %s29
      %p40 = scmp.ge.s32.totalorder %s39, 2
      %s41 = scalar_select %p40, 0, %s39
      %s42 = ssub.s32 %s29, %s41
      %s43 = ssub.s32 %s30, %s37
      %s44 = sor.u32 %s42, %s43
      %p45 = scmp.eq.s32.totalorder %s44, 0
      %s47 = sadd.s32 %s46, 1
      %s48 = scalar_select %p45, %s46, %s47
      %p51 = pneg %p45
      %p52 = scmp.eq.s32.totalorder %s22, 1
      %p53 = por %p51, %p52
      %p54 = scmp.ne.s32.totalorder %s46, %s49
      %p55 = scmp.eq.s32.totalorder %s22, 0
      %p56 = por %p54, %p55
      %p57 = scmp.ne.s32.totalorder %s46, %s49
      %p58 = scmp.eq.s32.totalorder %s27, 1
      %p59 = por %p57, %p58
      %p60 = scmp.ne.s32.totalorder %s49, %s50
      %p61 = scmp.eq.s32.totalorder %s27, 0
      %p62 = por %p60, %p61
      %p63 = scmp.ne.s32.totalorder %s49, %s50
      %p64 = scmp.eq.s32.totalorder %s28, 1
      %p65 = por %p63, %p64
      %p67 = scmp.ne.s32.totalorder %s50, %s66
      %p68 = scmp.eq.s32.totalorder %s28, 0
      %p69 = por %p67, %p68
      %s70 = ssub.s32 %s29, %s41
      %p71 = scmp.eq.s32.totalorder %s70, 0
      %s73 = sadd.s32 %s72, 1
      %s74 = scalar_select %p71, %s72, %s73
      %p77 = pneg %p71
      %p78 = scmp.eq.s32.totalorder %s22, 1
      %p79 = por %p77, %p78
      %p80 = scmp.ne.s32.totalorder %s72, %s75
      %p81 = scmp.eq.s32.totalorder %s22, 0
      %p82 = por %p80, %p81
      %p83 = scmp.ne.s32.totalorder %s72, %s75
      %p84 = scmp.eq.s32.totalorder %s27, 1
      %p85 = por %p83, %p84
      %p86 = scmp.ne.s32.totalorder %s75, %s76
      %p87 = scmp.eq.s32.totalorder %s27, 0
      %p88 = por %p86, %p87
      %p89 = scmp.ne.s32.totalorder %s75, %s76
      %p90 = scmp.eq.s32.totalorder %s28, 1
      %p91 = por %p89, %p90
      %p93 = scmp.ne.s32.totalorder %s76, %s92
      %p94 = scmp.eq.s32.totalorder %s28, 0
      %p95 = por %p93, %p94
      %s97 = sadd.s32 %s96, 1
      %p100 = scmp.eq.s32.totalorder %s22, 1
      %p101 = scmp.ne.s32.totalorder %s96, %s98
      %p102 = scmp.eq.s32.totalorder %s22, 0
      %p103 = por %p101, %p102
      %p104 = scmp.ne.s32.totalorder %s96, %s98
      %p105 = scmp.eq.s32.totalorder %s27, 1
      %p106 = por %p104, %p105
      %p107 = scmp.ne.s32.totalorder %s98, %s99
      %p108 = scmp.eq.s32.totalorder %s27, 0
      %p109 = por %p107, %p108
      %p110 = scmp.ne.s32.totalorder %s98, %s99
      %p111 = scmp.eq.s32.totalorder %s28, 1
      %p112 = por %p110, %p111
      %p114 = scmp.ne.s32.totalorder %s99, %s113
      %p115 = scmp.eq.s32.totalorder %s28, 0
      %p116 = por %p114, %p115
      %s118 = sadd.s32 %s117, 1
      %p121 = scmp.eq.s32.totalorder %s22, 1
      %p122 = scmp.ne.s32.totalorder %s117, %s119
      %p123 = scmp.eq.s32.totalorder %s22, 0
      %p124 = por %p122, %p123
      %p125 = scmp.ne.s32.totalorder %s117, %s119
      %p126 = scmp.eq.s32.totalorder %s27, 1
      %p127 = por %p125, %p126
      %p128 = scmp.ne.s32.totalorder %s119, %s120
      %p129 = scmp.eq.s32.totalorder %s27, 0
      %p130 = por %p128, %p129
      %p131 = scmp.ne.s32.totalorder %s119, %s120
      %p132 = scmp.eq.s32.totalorder %s28, 1
      %p133 = por %p131, %p132
      %p135 = scmp.ne.s32.totalorder %s120, %s134
      %p136 = scmp.eq.s32.totalorder %s28, 0
      %p137 = por %p135, %p136
      %s139 = sadd.s32 %s138, 1
      %p142 = scmp.eq.s32.totalorder %s22, 1
      %p143 = scmp.ne.s32.totalorder %s138, %s140
      %p144 = scmp.eq.s32.totalorder %s22, 0
      %p145 = por %p143, %p144
      %p146 = scmp.ne.s32.totalorder %s138, %s140
      %p147 = scmp.eq.s32.totalorder %s27, 1
      %p148 = por %p146, %p147
      %p149 = scmp.ne.s32.totalorder %s140, %s141
      %p150 = scmp.eq.s32.totalorder %s27, 0
      %p151 = por %p149, %p150
      %p152 = scmp.ne.s32.totalorder %s140, %s141
      %p153 = scmp.eq.s32.totalorder %s28, 1
      %p154 = por %p152, %p153
      %p156 = scmp.ne.s32.totalorder %s141, %s155
      %p157 = scmp.eq.s32.totalorder %s28, 0
      %p158 = por %p156, %p157
      %s160 = sadd.s32 %s159, 1
      %p163 = scmp.eq.s32.totalorder %s22, 1
      %p164 = scmp.ne.s32.totalorder %s159, %s161
      %p165 = scmp.eq.s32.totalorder %s22, 0
      %p166 = por %p164, %p165
      %p167 = scmp.ne.s32.totalorder %s159, %s161
      %p168 = scmp.eq.s32.totalorder %s27, 1
      %p169 = por %p167, %p168
      %p170 = scmp.ne.s32.totalorder %s161, %s162
      %p171 = scmp.eq.s32.totalorder %s27, 0
      %p172 = por %p170, %p171
      %p173 = scmp.ne.s32.totalorder %s161, %s162
      %p174 = scmp.eq.s32.totalorder %s28, 1
      %p175 = por %p173, %p174
      %p177 = scmp.ne.s32.totalorder %s162, %s176
      %p178 = scmp.eq.s32.totalorder %s28, 0
      %p179 = por %p177, %p178
      %s180 = ssub.s32 %s29, %s41
      %s181 = ssub.s32 %s30, %s37
      %s182 = sor.u32 %s180, %s181
      %p183 = scmp.eq.s32.totalorder %s182, 0
      %s185 = sadd.s32 %s184, 1
      %s186 = scalar_select %p183, %s184, %s185
      %p189 = pneg %p183
      %p190 = scmp.eq.s32.totalorder %s22, 1
      %p191 = por %p189, %p190
      %p192 = scmp.ne.s32.totalorder %s184, %s187
      %p193 = scmp.eq.s32.totalorder %s22, 0
      %p194 = por %p192, %p193
      %p195 = scmp.ne.s32.totalorder %s184, %s187
      %p196 = scmp.eq.s32.totalorder %s27, 1
      %p197 = por %p195, %p196
      %p198 = scmp.ne.s32.totalorder %s187, %s188
      %p199 = scmp.eq.s32.totalorder %s27, 0
      %p200 = por %p198, %p199
      %p201 = scmp.ne.s32.totalorder %s187, %s188
      %p202 = scmp.eq.s32.totalorder %s28, 1
      %p203 = por %p201, %p202
      %p205 = scmp.ne.s32.totalorder %s188, %s204
      %p206 = scmp.eq.s32.totalorder %s28, 0
      %p207 = por %p205, %p206
      %p208 = scmp.le.s32.totalorder 1, %s22
      %p209 = scmp.lt.s32.totalorder %s22, 3
      %p210 = pnand %p208, %p209
      %p211 = pneg %p210
      // Predicated region
      $region9: #{tpu_custom_call.1} parent=5 // pred_check
        _
      $region10: #{tpu_custom_call.1} parent=5 // pred_check_branch
        %213 = sbr.rel (%p210) target = $region12
      $region11: #{tpu_custom_call.1} parent=5 // pred_region
        %s214 = ssub.s32 %s22, 1
        // Predicated region
        $region13: #{tpu_custom_call.1} parent=11 // pred_check
          %p215 = pneg %p109
        $region14: #{tpu_custom_call.1} parent=11 // pred_check_branch
          %217 = sbr.rel (%p215) target = $region16
        $region15: #{tpu_custom_call.1} parent=11 // pred_region
          %219 = vsyncadd [#allocation6], 0
          %s220 = sshll.u32 %s2, 4
          %s221 = int_to_ptr.hbm [resolvable:$true] %s220
          %s222 = sshll.u32 [#allocation7], 4
          %s223 = int_to_ptr.vmem [resolvable:$true] %s222
          %228 = dma.hbm_to_vmem [thread:$0]  %s221, 256, %s223, [#allocation6], 64, 64, 4
        $region16: #{tpu_custom_call.1} parent=11 // pred_fallthru
          _
        // Predicated region
        $region17: #{tpu_custom_call.1} parent=11 // pred_check
          %p229 = pneg %p130
        $region18: #{tpu_custom_call.1} parent=11 // pred_check_branch
          %231 = sbr.rel (%p229) target = $region20
        $region19: #{tpu_custom_call.1} parent=11 // pred_region
          _
        $region20: #{tpu_custom_call.1} parent=11 // pred_fallthru
          _
        // Predicated region
        $region21: #{tpu_custom_call.1} parent=11 // pred_check
          %p232 = pneg %p151
        $region22: #{tpu_custom_call.1} parent=11 // pred_check_branch
          %234 = sbr.rel (%p232) target = $region24
        $region23: #{tpu_custom_call.1} parent=11 // pred_region
          %236 = vsyncadd [#allocation9], 0
          %s237 = sshll.u32 %s4, 4
          %s238 = int_to_ptr.hbm [resolvable:$true] %s237
          %s239 = sshll.u32 [#allocation8], 4
          %s240 = int_to_ptr.vmem [resolvable:$true] %s239
          %245 = dma.hbm_to_vmem [thread:$0]  %s238, 256, %s240, [#allocation9], 64, 64, 4
        $region24: #{tpu_custom_call.1} parent=11 // pred_fallthru
          _
        // Predicated region
        $region25: #{tpu_custom_call.1} parent=11 // pred_check
          %p246 = pneg %p172
        $region26: #{tpu_custom_call.1} parent=11 // pred_check_branch
          %248 = sbr.rel (%p246) target = $region28
        $region27: #{tpu_custom_call.1} parent=11 // pred_region
          _
        $region28: #{tpu_custom_call.1} parent=11 // pred_fallthru
          _
      $region12: #{tpu_custom_call.1} parent=5 // pred_fallthru
        _
      %p249 = scmp.lt.s32.totalorder %s22, 2
      // Predicated region
      $region29: #{tpu_custom_call.1} parent=5 // pred_check
        %p250 = pneg %p249
      $region30: #{tpu_custom_call.1} parent=5 // pred_check_branch
        %252 = sbr.rel (%p250) target = $region32
      $region31: #{tpu_custom_call.1} parent=5 // pred_region
        // Predicated region
        $region33: #{tpu_custom_call.1} parent=31 // pred_check
          %p253 = pneg %p56
        $region34: #{tpu_custom_call.1} parent=31 // pred_check_branch
          %255 = sbr.rel (%p253) target = $region36
        $region35: #{tpu_custom_call.1} parent=31 // pred_region
          %s256 = sand.u32 %s46, 1
          %s257 = scalar_lea.sflag [#allocation3], %s256
          %s258 = sand.u32 %s46, 1
          %s259 = smul.addr %s258, 4
          %s260 = scalar_lea.vmem [#allocation2], %s259
          %262 = vsyncadd %s257, 0
          %s263 = sadd.s32 %s30, %s29
          %s264 = smul.addr %s263, 4
          %s265 = scalar_lea.hbm %s0, %s264
          %s267 = sshll.u32 %s265, 4
          %s268 = int_to_ptr.hbm [resolvable:$true] %s267
          %s269 = sshll.u32 %s260, 4
          %s270 = int_to_ptr.vmem [resolvable:$true] %s269
          %272 = dma.hbm_to_vmem [thread:$0]  %s268, 64, %s270, %s257
        $region36: #{tpu_custom_call.1} parent=31 // pred_fallthru
          _
        // Predicated region
        $region37: #{tpu_custom_call.1} parent=31 // pred_check
          %p273 = pneg %p82
        $region38: #{tpu_custom_call.1} parent=31 // pred_check_branch
          %275 = sbr.rel (%p273) target = $region40
        $region39: #{tpu_custom_call.1} parent=31 // pred_region
          %s276 = sand.u32 %s22, 1
          %s277 = scalar_lea.sflag [#allocation6], %s276
          %s278 = sand.u32 %s72, 1
          %s279 = smul.addr %s278, 4
          %s280 = scalar_lea.vmem [#allocation5], %s279
          %282 = vsyncadd %s277, 0
          %s283 = smul.addr %s29, 4
          %s284 = scalar_lea.hbm %s1, %s283
          %s286 = sshll.u32 %s284, 4
          %s287 = int_to_ptr.hbm [resolvable:$true] %s286
          %s288 = sshll.u32 %s280, 4
          %s289 = int_to_ptr.vmem [resolvable:$true] %s288
          %291 = dma.hbm_to_vmem [thread:$0]  %s287, 64, %s289, %s277
        $region40: #{tpu_custom_call.1} parent=31 // pred_fallthru
          _
      $region32: #{tpu_custom_call.1} parent=5 // pred_fallthru
        _
      %p292 = scmp.le.s32.totalorder 1, %s22
      %p293 = scmp.lt.s32.totalorder %s22, 3
      %p294 = pnand %p292, %p293
      %p295 = pneg %p294
      // Predicated region
      $region41: #{tpu_custom_call.1} parent=5 // pred_check
        _
      $region42: #{tpu_custom_call.1} parent=5 // pred_check_branch
        %297 = sbr.rel (%p294) target = $region44
      $region43: #{tpu_custom_call.1} parent=5 // pred_region
        %s298 = ssub.s32 %s22, 1
        %s299 = sand.u32 %s49, 1
        %s300 = scalar_lea.sflag [#allocation3], %s299
        %s301 = sand.u32 %s49, 1
        %s302 = smul.addr %s301, 4
        %s303 = scalar_lea.vmem [#allocation2], %s302
        // Predicated region
        $region45: #{tpu_custom_call.1} parent=43 // pred_check
          %p304 = pneg %p62
        $region46: #{tpu_custom_call.1} parent=43 // pred_check_branch
          %306 = sbr.rel (%p304) target = $region48
        $region47: #{tpu_custom_call.1} parent=43 // pred_region
          %308 = dma.done %s300, 64
        $region48: #{tpu_custom_call.1} parent=43 // pred_fallthru
          _
        %s309 = sand.u32 %s27, 1
        %s310 = scalar_lea.sflag [#allocation6], %s309
        %s311 = sand.u32 %s75, 1
        %s312 = smul.addr %s311, 4
        %s313 = scalar_lea.vmem [#allocation5], %s312
        // Predicated region
        $region49: #{tpu_custom_call.1} parent=43 // pred_check
          %p314 = pneg %p88
        $region50: #{tpu_custom_call.1} parent=43 // pred_check_branch
          %316 = sbr.rel (%p314) target = $region52
        $region51: #{tpu_custom_call.1} parent=43 // pred_region
          %318 = dma.done %s310, 64
        $region52: #{tpu_custom_call.1} parent=43 // pred_fallthru
          _
        // Predicated region
        $region53: #{tpu_custom_call.1} parent=43 // pred_check
          %p319 = pneg %p109
        $region54: #{tpu_custom_call.1} parent=43 // pred_check_branch
          %321 = sbr.rel (%p319) target = $region56
        $region55: #{tpu_custom_call.1} parent=43 // pred_region
          %323 = dma.done [#allocation6], 256
        $region56: #{tpu_custom_call.1} parent=43 // pred_fallthru
          _
        // Predicated region
        $region57: #{tpu_custom_call.1} parent=43 // pred_check
          %p324 = pneg %p151
        $region58: #{tpu_custom_call.1} parent=43 // pred_check_branch
          %326 = sbr.rel (%p324) target = $region60
        $region59: #{tpu_custom_call.1} parent=43 // pred_region
          %328 = dma.done [#allocation9], 256
        $region60: #{tpu_custom_call.1} parent=43 // pred_fallthru
          _
        %s329 = sand.u32 %s49, 1
        %s330 = scalar_lea.sflag [#allocation3], %s329
        %s331 = sand.u32 %s49, 1
        %s332 = smul.addr %s331, 4
        %s333 = scalar_lea.vmem [#allocation2], %s332
        %p334 = pneg %p62
        %p335 = pneg %p59
        %s336 = sand.u32 %s27, 1
        %s337 = scalar_lea.sflag [#allocation6], %s336
        %s338 = sand.u32 %s75, 1
        %s339 = smul.addr %s338, 4
        %s340 = scalar_lea.vmem [#allocation5], %s339
        %p341 = pneg %p88
        %p342 = pneg %p85
        %p343 = pneg %p109
        %p344 = pneg %p106
        %p345 = pneg %p130
        %p346 = pneg %p127
        %p347 = pneg %p151
        %p348 = pneg %p148
        %p349 = pneg %p172
        %p350 = pneg %p169
        %p351 = pneg %p200
        %p352 = pneg %p197
        %s353 = sand.u32 %s187, 1
        %s354 = scalar_lea.sflag [#allocation4], %s353
        %s355 = sand.u32 %s187, 1
        %s356 = smul.addr %s355, 8
        %s357 = scalar_lea.vmem [#allocation10], %s356
        %v359 = vld [vmem:[%s303] sm:$0xf]
        %v360 = vld [vmem:[%s313] sm:$0xf]
        %v361 = vld [vmem:[#allocation7] sm:$0xf]
        %v362 = vld [vmem:[#allocation7 + $0x4] sm:$0xf]
        %v363 = vld [vmem:[#allocation7 + $0x8] sm:$0xf]
        %v364 = vld [vmem:[#allocation7 + $0xc] sm:$0xf]
        %v365 = vld [vmem:[%s3] sm:$0x1]
        %v367 = vperm.slane %v365, 0
        %v373 = vunpack.c.l.b16 %v361
        %v374 = vunpack.c.l.b16 %v362
        %v375 = vunpack.c.l.b16 %v363
        %v376 = vunpack.c.l.b16 %v364
        %v377 = vpack.c.b16 %v374, %v373
        %v378 = vpack.c.b16 %v376, %v375
        %vm381 = vcmask 261120
        %v383 = vsel %vm381, %v359, 0
        %385 = vmatpush.bf16.msra.mxu0 0
        %386 = vmatpush.bf16.msra.mxu0 0
        %387 = vmatpush.bf16.msra.mxu0 0
        %388 = vmatpush.bf16.msra.mxu0 0
        %389 = vmatpush.bf16.msra.mxu0 0
        %390 = vmatpush.bf16.msra.mxu0 0
        %391 = vmatpush.bf16.msra.mxu0 %v378
        %392 = vmatpush.bf16.msra.mxu0 %v377
        %393 = vmatmul.bf16.gmra.mxu0 %v383
        %v394 = vpop.f32.mrf.mxu0
        %v395 = vadd.f32 %v367, %v394
        %v396 = vpop.f32.mrf.mxu0
        %397 = vdwg.mxu0
        %v398 = vmul.f32 %v395, 0.35355338
        %v399 = vpack.c.bf16 %v398, %v398
        %400 = vrot.lane.b32.xlu0 %v377, 96
        %v401 = vpop.permute.xlu0 %400
        %402 = vrot.lane.b32.xlu0 %v378, 96
        %v403 = vpop.permute.xlu0 %402
        %406 = vrot.lane.b32.xlu0 %v367, 96
        %v407 = vpop.permute.xlu0 %406
        %v410 = vsel %vm381, %v360, 0
        %412 = vmatpush.bf16.msra.mxu0 0
        %413 = vmatpush.bf16.msra.mxu0 0
        %414 = vmatpush.bf16.msra.mxu0 0
        %415 = vmatpush.bf16.msra.mxu0 0
        %416 = vmatpush.bf16.msra.mxu0 0
        %417 = vmatpush.bf16.msra.mxu0 0
        %418 = vmatpush.bf16.msra.mxu0 %v403
        %419 = vmatpush.bf16.msra.mxu0 %v401
        %420 = vmatmul.bf16.gmra.mxu0 %v410
        %v421 = vpop.f32.mrf.mxu0
        %v422 = vadd.f32 %v407, %v421
        %v423 = vpop.f32.mrf.mxu0
        %424 = vdwg.mxu0
        %v425 = vpack.c.bf16 %v422, %v422
        %v426 = vld [vmem:[%s5] sm:$0x1]
        %v428 = vperm.slane %v426, 0
        %vm430 = vcmask 64512
        %v432 = vsel %vm430, %v399, 0
        %v435 = vsel %vm430, %v425, 0
        %437 = vmatpush.bf16.xpose.msra.mxu0 0
        %438 = vmatpush.bf16.xpose.msra.mxu0 0
        %439 = vmatpush.bf16.xpose.msra.mxu0 0
        %440 = vmatpush.bf16.xpose.msra.mxu0 0
        %441 = vmatpush.bf16.xpose.msra.mxu0 0
        %442 = vmatpush.bf16.xpose.msra.mxu0 0
        %443 = vmatpush.bf16.xpose.msra.mxu0 0
        %444 = vmatpush.bf16.xpose.msra.mxu0 %v435
        %445 = vmatmul.bf16.gmra.mxu0 %v432
        %v446 = vpop.f32.mrf.mxu0
        %v447 = vadd.f32 0.0, %v446
        %v448 = vpop.f32.mrf.mxu0
        %449 = vdwg.mxu0
        %v450 = vsel %vm430, %v447, -inf
        %451 = vmax.xlane.f32.xlu0 %v450
        %v452 = vpop.xlane.xlu0 %451
        %v453 = vsub.f32 -inf, %v452
        %v454 = vmul.f32 %v453, 1.442695
        %v455 = vpow.pop %v454
        %v456 = vsub.f32 %v447, %v452
        %v457 = vmul.f32 %v456, 1.442695
        %v458 = vpow.pop %v457
        %v459 = vmul.f32 %v455, 0.0
        %v460 = vsel %vm430, %v458, 0.0
        %461 = vadd.xlane.f32.xlu0 %v460
        %v462 = vpop.xlane.xlu0 %461
        %v463 = vadd.f32 %v459, %v462
        %v464 = vpack.c.bf16 %v458, %v458
        %v466 = vunpack.c.l.b16 %v425
        %v467 = vpack.c.b16 %v466, %v466
        %468 = vrot.lane.b32.xlu0 %v467, 96
        %v469 = vpop.permute.xlu0 %468
        %v471 = vsel %vm430, %v464, 0
        %vm473 = vcmask 1043456
        %v475 = vsel %vm473, %v469, 0
        %477 = vmatpush.bf16.msra.mxu0 0
        %478 = vmatpush.bf16.msra.mxu0 0
        %479 = vmatpush.bf16.msra.mxu0 0
        %480 = vmatpush.bf16.msra.mxu0 0
        %481 = vmatpush.bf16.msra.mxu0 0
        %482 = vmatpush.bf16.msra.mxu0 0
        %483 = vmatpush.bf16.msra.mxu0 0
        %484 = vmatpush.bf16.msra.mxu0 %v475
        %485 = vmatmul.bf16.gmra.mxu0 %v471
        %v486 = vpop.f32.mrf.mxu0
        %v487 = vadd.f32 0.0, %v486
        %v488 = vpop.f32.mrf.mxu0
        %489 = vdwg.mxu0
        %v490 = vadd.f32 %v459, %v487
        %v491 = vrcp.pop %v463
        %v492 = vmul.f32 %v490, %v491
        %v493 = vpack.c.bf16 %v492, %v492
        %v494 = vld [vmem:[#allocation8] sm:$0xf]
        %v496 = vsel %vm430, %v493, 0
        %v499 = vsel %vm473, %v494, 0
        %501 = vmatpush.bf16.msra.mxu0 0
        %502 = vmatpush.bf16.msra.mxu0 0
        %503 = vmatpush.bf16.msra.mxu0 0
        %504 = vmatpush.bf16.msra.mxu0 0
        %505 = vmatpush.bf16.msra.mxu0 0
        %506 = vmatpush.bf16.msra.mxu0 0
        %507 = vmatpush.bf16.msra.mxu0 0
        %508 = vmatpush.bf16.msra.mxu0 %v499
        %509 = vmatmul.bf16.gmra.mxu0 %v496
        %v510 = vpop.f32.mrf.mxu0
        %v511 = vadd.f32 0.0, %v510
        %v512 = vpop.f32.mrf.mxu0
        %513 = vdwg.mxu0
        %v514 = vadd.f32 %v428, %v511
        %v516 = vunpack.c.l.b16 %v399
        %v517 = vpack.c.b16 %v516, %v516
        %518 = vrot.lane.b32.xlu0 %v517, 120
        %v519 = vpop.permute.xlu0 %518
        %520 = vrot.lane.b32.xlu0 %v467, 120
        %v521 = vpop.permute.xlu0 %520
        %v523 = vsel %vm430, %v519, 0
        %v526 = vsel %vm430, %v521, 0
        %528 = vmatpush.bf16.xpose.msra.mxu0 0
        %529 = vmatpush.bf16.xpose.msra.mxu0 0
        %530 = vmatpush.bf16.xpose.msra.mxu0 0
        %531 = vmatpush.bf16.xpose.msra.mxu0 0
        %532 = vmatpush.bf16.xpose.msra.mxu0 0
        %533 = vmatpush.bf16.xpose.msra.mxu0 0
        %534 = vmatpush.bf16.xpose.msra.mxu0 0
        %535 = vmatpush.bf16.xpose.msra.mxu0 %v526
        %536 = vmatmul.bf16.gmra.mxu0 %v523
        %v537 = vpop.f32.mrf.mxu0
        %v538 = vadd.f32 0.0, %v537
        %v539 = vpop.f32.mrf.mxu0
        %540 = vdwg.mxu0
        %v541 = vsel %vm430, %v538, -inf
        %542 = vmax.xlane.f32.xlu0 %v541
        %v543 = vpop.xlane.xlu0 %542
        %v544 = vsub.f32 -inf, %v543
        %v545 = vmul.f32 %v544, 1.442695
        %v546 = vpow.pop %v545
        %v547 = vsub.f32 %v538, %v543
        %v548 = vmul.f32 %v547, 1.442695
        %v549 = vpow.pop %v548
        %v550 = vmul.f32 %v546, 0.0
        %v551 = vsel %vm430, %v549, 0.0
        %552 = vadd.xlane.f32.xlu0 %v551
        %v553 = vpop.xlane.xlu0 %552
        %v554 = vadd.f32 %v550, %v553
        %v555 = vpack.c.bf16 %v549, %v549
        %556 = vrot.lane.b32.xlu0 %v467, 88
        %v557 = vpop.permute.xlu0 %556
        %v559 = vsel %vm430, %v555, 0
        %v562 = vsel %vm473, %v557, 0
        %564 = vmatpush.bf16.msra.mxu0 0
        %565 = vmatpush.bf16.msra.mxu0 0
        %566 = vmatpush.bf16.msra.mxu0 0
        %567 = vmatpush.bf16.msra.mxu0 0
        %568 = vmatpush.bf16.msra.mxu0 0
        %569 = vmatpush.bf16.msra.mxu0 0
        %570 = vmatpush.bf16.msra.mxu0 0
        %571 = vmatpush.bf16.msra.mxu0 %v562
        %572 = vmatmul.bf16.gmra.mxu0 %v559
        %v573 = vpop.f32.mrf.mxu0
        %v574 = vadd.f32 0.0, %v573
        %v575 = vpop.f32.mrf.mxu0
        %576 = vdwg.mxu0
        %v577 = vadd.f32 %v550, %v574
        %v578 = vrcp.pop %v554
        %v579 = vmul.f32 %v577, %v578
        %v580 = vpack.c.bf16 %v579, %v579
        %v581 = vld [vmem:[#allocation8 + $0x4] sm:$0xf]
        %v583 = vsel %vm430, %v580, 0
        %v586 = vsel %vm473, %v581, 0
        %588 = vmatpush.bf16.msra.mxu0 0
        %589 = vmatpush.bf16.msra.mxu0 0
        %590 = vmatpush.bf16.msra.mxu0 0
        %591 = vmatpush.bf16.msra.mxu0 0
        %592 = vmatpush.bf16.msra.mxu0 0
        %593 = vmatpush.bf16.msra.mxu0 0
        %594 = vmatpush.bf16.msra.mxu0 0
        %595 = vmatpush.bf16.msra.mxu0 %v586
        %596 = vmatmul.bf16.gmra.mxu0 %v583
        %v597 = vpop.f32.mrf.mxu0
        %v598 = vadd.f32 0.0, %v597
        %v599 = vpop.f32.mrf.mxu0
        %600 = vdwg.mxu0
        %v601 = vadd.f32 %v514, %v598
        %602 = vrot.lane.b32.xlu0 %v517, 112
        %v603 = vpop.permute.xlu0 %602
        %604 = vrot.lane.b32.xlu0 %v467, 112
        %v605 = vpop.permute.xlu0 %604
        %v607 = vsel %vm430, %v603, 0
        %v610 = vsel %vm430, %v605, 0
        %612 = vmatpush.bf16.xpose.msra.mxu0 0
        %613 = vmatpush.bf16.xpose.msra.mxu0 0
        %614 = vmatpush.bf16.xpose.msra.mxu0 0
        %615 = vmatpush.bf16.xpose.msra.mxu0 0
        %616 = vmatpush.bf16.xpose.msra.mxu0 0
        %617 = vmatpush.bf16.xpose.msra.mxu0 0
        %618 = vmatpush.bf16.xpose.msra.mxu0 0
        %619 = vmatpush.bf16.xpose.msra.mxu0 %v610
        %620 = vmatmul.bf16.gmra.mxu0 %v607
        %v621 = vpop.f32.mrf.mxu0
        %v622 = vadd.f32 0.0, %v621
        %v623 = vpop.f32.mrf.mxu0
        %624 = vdwg.mxu0
        %v625 = vsel %vm430, %v622, -inf
        %626 = vmax.xlane.f32.xlu0 %v625
        %v627 = vpop.xlane.xlu0 %626
        %v628 = vsub.f32 -inf, %v627
        %v629 = vmul.f32 %v628, 1.442695
        %v630 = vpow.pop %v629
        %v631 = vsub.f32 %v622, %v627
        %v632 = vmul.f32 %v631, 1.442695
        %v633 = vpow.pop %v632
        %v634 = vmul.f32 %v630, 0.0
        %v635 = vsel %vm430, %v633, 0.0
        %636 = vadd.xlane.f32.xlu0 %v635
        %v637 = vpop.xlane.xlu0 %636
        %v638 = vadd.f32 %v634, %v637
        %v639 = vpack.c.bf16 %v633, %v633
        %640 = vrot.lane.b32.xlu0 %v467, 80
        %v641 = vpop.permute.xlu0 %640
        %v643 = vsel %vm430, %v639, 0
        %v646 = vsel %vm473, %v641, 0
        %648 = vmatpush.bf16.msra.mxu0 0
        %649 = vmatpush.bf16.msra.mxu0 0
        %650 = vmatpush.bf16.msra.mxu0 0
        %651 = vmatpush.bf16.msra.mxu0 0
        %652 = vmatpush.bf16.msra.mxu0 0
        %653 = vmatpush.bf16.msra.mxu0 0
        %654 = vmatpush.bf16.msra.mxu0 0
        %655 = vmatpush.bf16.msra.mxu0 %v646
        %656 = vmatmul.bf16.gmra.mxu0 %v643
        %v657 = vpop.f32.mrf.mxu0
        %v658 = vadd.f32 0.0, %v657
        %v659 = vpop.f32.mrf.mxu0
        %660 = vdwg.mxu0
        %v661 = vadd.f32 %v634, %v658
        %v662 = vrcp.pop %v638
        %v663 = vmul.f32 %v661, %v662
        %v664 = vpack.c.bf16 %v663, %v663
        %v665 = vld [vmem:[#allocation8 + $0x8] sm:$0xf]
        %v667 = vsel %vm430, %v664, 0
        %v670 = vsel %vm473, %v665, 0
        %672 = vmatpush.bf16.msra.mxu0 0
        %673 = vmatpush.bf16.msra.mxu0 0
        %674 = vmatpush.bf16.msra.mxu0 0
        %675 = vmatpush.bf16.msra.mxu0 0
        %676 = vmatpush.bf16.msra.mxu0 0
        %677 = vmatpush.bf16.msra.mxu0 0
        %678 = vmatpush.bf16.msra.mxu0 0
        %679 = vmatpush.bf16.msra.mxu0 %v670
        %680 = vmatmul.bf16.gmra.mxu0 %v667
        %v681 = vpop.f32.mrf.mxu0
        %v682 = vadd.f32 0.0, %v681
        %v683 = vpop.f32.mrf.mxu0
        %684 = vdwg.mxu0
        %v685 = vadd.f32 %v601, %v682
        %686 = vrot.lane.b32.xlu0 %v517, 104
        %v687 = vpop.permute.xlu0 %686
        %688 = vrot.lane.b32.xlu0 %v467, 104
        %v689 = vpop.permute.xlu0 %688
        %v691 = vsel %vm430, %v687, 0
        %v694 = vsel %vm430, %v689, 0
        %696 = vmatpush.bf16.xpose.msra.mxu0 0
        %697 = vmatpush.bf16.xpose.msra.mxu0 0
        %698 = vmatpush.bf16.xpose.msra.mxu0 0
        %699 = vmatpush.bf16.xpose.msra.mxu0 0
        %700 = vmatpush.bf16.xpose.msra.mxu0 0
        %701 = vmatpush.bf16.xpose.msra.mxu0 0
        %702 = vmatpush.bf16.xpose.msra.mxu0 0
        %703 = vmatpush.bf16.xpose.msra.mxu0 %v694
        %704 = vmatmul.bf16.gmra.mxu0 %v691
        %v705 = vpop.f32.mrf.mxu0
        %v706 = vadd.f32 0.0, %v705
        %v707 = vpop.f32.mrf.mxu0
        %708 = vdwg.mxu0
        %v709 = vsel %vm430, %v706, -inf
        %710 = vmax.xlane.f32.xlu0 %v709
        %v711 = vpop.xlane.xlu0 %710
        %v712 = vsub.f32 -inf, %v711
        %v713 = vmul.f32 %v712, 1.442695
        %v714 = vpow.pop %v713
        %v715 = vsub.f32 %v706, %v711
        %v716 = vmul.f32 %v715, 1.442695
        %v717 = vpow.pop %v716
        %v718 = vmul.f32 %v714, 0.0
        %v719 = vsel %vm430, %v717, 0.0
        %720 = vadd.xlane.f32.xlu0 %v719
        %v721 = vpop.xlane.xlu0 %720
        %v722 = vadd.f32 %v718, %v721
        %v723 = vpack.c.bf16 %v717, %v717
        %724 = vrot.lane.b32.xlu0 %v467, 72
        %v725 = vpop.permute.xlu0 %724
        %v727 = vsel %vm430, %v723, 0
        %v730 = vsel %vm473, %v725, 0
        %732 = vmatpush.bf16.msra.mxu0 0
        %733 = vmatpush.bf16.msra.mxu0 0
        %734 = vmatpush.bf16.msra.mxu0 0
        %735 = vmatpush.bf16.msra.mxu0 0
        %736 = vmatpush.bf16.msra.mxu0 0
        %737 = vmatpush.bf16.msra.mxu0 0
        %738 = vmatpush.bf16.msra.mxu0 0
        %739 = vmatpush.bf16.msra.mxu0 %v730
        %740 = vmatmul.bf16.gmra.mxu0 %v727
        %v741 = vpop.f32.mrf.mxu0
        %v742 = vadd.f32 0.0, %v741
        %v743 = vpop.f32.mrf.mxu0
        %744 = vdwg.mxu0
        %v745 = vadd.f32 %v718, %v742
        %v746 = vrcp.pop %v722
        %v747 = vmul.f32 %v745, %v746
        %v748 = vpack.c.bf16 %v747, %v747
        %v749 = vld [vmem:[#allocation8 + $0xc] sm:$0xf]
        %v751 = vsel %vm430, %v748, 0
        %v754 = vsel %vm473, %v749, 0
        %756 = vmatpush.bf16.msra.mxu0 0
        %757 = vmatpush.bf16.msra.mxu0 0
        %758 = vmatpush.bf16.msra.mxu0 0
        %759 = vmatpush.bf16.msra.mxu0 0
        %760 = vmatpush.bf16.msra.mxu0 0
        %761 = vmatpush.bf16.msra.mxu0 0
        %762 = vmatpush.bf16.msra.mxu0 0
        %763 = vmatpush.bf16.msra.mxu0 %v754
        %764 = vmatmul.bf16.gmra.mxu0 %v751
        %v765 = vpop.f32.mrf.mxu0
        %v766 = vadd.f32 0.0, %v765
        %v767 = vpop.f32.mrf.mxu0
        %768 = vdwg.mxu0
        %v769 = vadd.f32 %v685, %v766
        %770 = vst.msk [vmem:[%s357] sm:$0xff] %vm381, %v769
        %s771 = sand.u32 %s187, 1
        %s772 = scalar_lea.sflag [#allocation4], %s771
        %s773 = sand.u32 %s187, 1
        %s774 = smul.addr %s773, 8
        %s775 = scalar_lea.vmem [#allocation10], %s774
        // Predicated region
        $region61: #{tpu_custom_call.1} parent=43 // pred_check
          %p776 = pneg %p197
        $region62: #{tpu_custom_call.1} parent=43 // pred_check_branch
          %778 = sbr.rel (%p776) target = $region64
        $region63: #{tpu_custom_call.1} parent=43 // pred_region
          %780 = vsyncadd %s772, 0
          %s781 = sadd.s32 %s32, %s31
          %s782 = smul.addr %s781, 8
          %s783 = scalar_lea.hbm %s6, %s782
          %s785 = sshll.u32 %s775, 4
          %s786 = int_to_ptr.vmem [resolvable:$true] %s785
          %s787 = sshll.u32 %s783, 4
          %s788 = int_to_ptr.hbm [resolvable:$true] %s787
          %790 = dma.vmem_to_hbm [thread:$0]  %s786, 128, %s788, %s772
        $region64: #{tpu_custom_call.1} parent=43 // pred_fallthru
          _
      $region44: #{tpu_custom_call.1} parent=5 // pred_fallthru
        _
      %p791 = scmp.le.s32.totalorder 2, %s22
      // Predicated region
      $region65: #{tpu_custom_call.1} parent=5 // pred_check
        %p792 = pneg %p791
      $region66: #{tpu_custom_call.1} parent=5 // pred_check_branch
        %794 = sbr.rel (%p792) target = $region68
      $region67: #{tpu_custom_call.1} parent=5 // pred_region
        %s795 = ssub.s32 %s22, 2
        // Predicated region
        $region69: #{tpu_custom_call.1} parent=67 // pred_check
          %p796 = pneg %p203
        $region70: #{tpu_custom_call.1} parent=67 // pred_check_branch
          %798 = sbr.rel (%p796) target = $region72
        $region71: #{tpu_custom_call.1} parent=67 // pred_region
          %s799 = sand.u32 %s188, 1
          %s800 = scalar_lea.sflag [#allocation4], %s799
          %s801 = sand.u32 %s188, 1
          %s802 = smul.addr %s801, 8
          %s803 = scalar_lea.vmem [#allocation10], %s802
          %805 = dma.done %s800, 128
        $region72: #{tpu_custom_call.1} parent=67 // pred_fallthru
          _
      $region68: #{tpu_custom_call.1} parent=5 // pred_fallthru
        _
    $region6: #{tpu_custom_call.1} parent=1 // loop_footer
      %s26 = sadd.s32 1, %s22
    $region7: #{tpu_custom_call.1} parent=1 // loop_footer_branch
      %21 = sbr.rel target = $region3
    $region8: #{tpu_custom_call.1} parent=1 // loop_exit
      _
    %806 = vsyncpa [#allocation3], 1
    %s807 = scalar_lea.sflag [#allocation3], 1
    %808 = vsyncpa %s807, 1
    %809 = vsyncpa [#allocation6], 1
    %s810 = scalar_lea.sflag [#allocation6], 1
    %811 = vsyncpa %s810, 1
    %812 = vsyncpa [#allocation9], 1
    %813 = vsyncpa [#allocation4], 1
    %s814 = scalar_lea.sflag [#allocation4], 1
    %815 = vsyncpa %s814, 1

</llo_original>
